<compile_context>
chip_gen: v5e
topology: v5e:2x2
jax: 0.10.0
libtpu: 0.0.40
codegen_flags: <defaults>
</compile_context>

<pallas_src>
import math

import jax
import jax.numpy as jnp
from jax.experimental import pallas as pl
from jax.experimental.pallas import tpu as pltpu


_MAX_N_TILE = 512  # lane columns (batches*T) per grid step: bounds the per-tile
                   # block-diagonal fc weights (3 * tile^2 * 4B <= 3 MiB) plus the
                   # double-buffered data slabs well inside scoped VMEM on every
                   # generation (v5e/v6e 128 MiB, v7x 64 MiB physical).


def _choose_batches_per_tile(B, T):
    """Batches per grid step along the flattened B*T (lane) axis."""
    N = B * T
    if N <= _MAX_N_TILE:
        return B                                   # single grid point
    # Tiles must be batch-aligned (shared block-diag fc weights) and a multiple
    # of 128 lanes (BlockSpec divisibility + unmasked vst).
    unit_b = 128 // math.gcd(T, 128)               # min batches per aligned tile
    if B % unit_b != 0 or unit_b * T > _MAX_N_TILE:
        # TODO(synk): for lane-misaligned T with huge B, switch to a row-tiled
        # (B*C, T) layout instead of falling back to a single full-width tile.
        return B
    best = unit_b
    bt = unit_b
    while bt * T <= _MAX_N_TILE:
        if B % bt == 0:
            best = bt
        bt += unit_b
    return best


def _imputation_kernel(w2z_ref, w1_ref, w3_ref, w4_ref,
                       b1_ref, b2_ref, b3_ref, b4_ref,
                       x_ref, c_ref, m_ref, d_ref,
                       xhat_ref, p_ref):
    # Layouts (all 2-D, channel-major / batch-flattened):
    #   data slabs x/c/m/delta:          (C, tn)
    #   block-diag fc weights kron(I,WT): (tn, tn)  (same for every tile)
    #   ZLinear weight (diag=0):         (C, C)
    #   biases (tiled per batch):        (1, tn)
    x = x_ref[...]
    c = c_ref[...]
    m = m_ref[...]
    delta = d_ref[...]

    # fc1 over the T axis: one MXU matmul covering every batch in this tile.
    z_t = jnp.dot(c, w1_ref[...], preferred_element_type=jnp.float32) + b1_ref[...]

    # Imputation mix.
    z_t_hat = m * c + (1.0 - m) * z_t

    # ZLinear: (C, C) @ (C, tn) -- one lane-dense matmul over all batches in tile.
    out = jnp.dot(w2z_ref[...], z_t_hat,
                  preferred_element_type=jnp.float32) + b2_ref[...]

    # Gate: sigmoid(relu(fc3(delta)) + relu(fc4(m))).
    g3 = jnp.maximum(
        jnp.dot(delta, w3_ref[...], preferred_element_type=jnp.float32) + b3_ref[...],
        0.0)
    g4 = jnp.maximum(
        jnp.dot(m, w4_ref[...], preferred_element_type=jnp.float32) + b4_ref[...],
        0.0)
    namida = 1.0 / (1.0 + jnp.exp(-(g3 + g4)))      # sigmoid via EUP exp

    x_hat = (1.0 - namida) * z_t + namida * out
    p = m * x + (1.0 - m) * x_hat

    xhat_ref[...] = x_hat.astype(xhat_ref.dtype)
    p_ref[...] = p.astype(p_ref.dtype)


def imputation_block(params, x, c, m, delta):
    """ImputationBlock forward.  x, c, m, delta: (B, C, T) -> (x_hat, p)."""
    w1, b1, w2, b2, w3, b3, w4, b4 = params
    B, C, T = x.shape
    N = B * T
    dt = x.dtype

    bt = _choose_batches_per_tile(B, T)             # batches per grid step
    tn = bt * T                                     # lane columns per grid step
    grid = (N // tn,)

    # --- grid-invariant parameter prep (hoisted out of the kernel, runs once) ---
    w2z = (w2 - jnp.diag(jnp.diagonal(w2))).astype(dt)   # zero ZLinear diagonal ONCE
    eye_bt = jnp.eye(bt, dtype=dt)
    # One (tn, tn) block-diagonal weight per fc layer -- identical for every tile
    # (tiles are batch-aligned), replicated across the grid, fetched once.
    w1_blk = jnp.kron(eye_bt, w1.T.astype(dt))
    w3_blk = jnp.kron(eye_bt, w3.T.astype(dt))
    w4_blk = jnp.kron(eye_bt, w4.T.astype(dt))
    b1_f = jnp.tile(b1.astype(dt), bt).reshape(1, tn)
    b2_f = jnp.tile(b2.astype(dt), bt).reshape(1, tn)
    b3_f = jnp.tile(b3.astype(dt), bt).reshape(1, tn)
    b4_f = jnp.tile(b4.astype(dt), bt).reshape(1, tn)

    # --- lane-dense layout: (B, C, T) -> (C, B*T) (done by XLA, outside kernel) ---
    def to_flat(a):
        return jnp.transpose(a, (1, 0, 2)).reshape(C, N)

    x_f, c_f, m_f, d_f = (to_flat(a) for a in (x, c, m, delta))

    data_spec = pl.BlockSpec((C, tn), lambda n: (0, n))
    blk_spec = pl.BlockSpec((tn, tn), lambda n: (0, 0))   # replicated across grid
    bias_spec = pl.BlockSpec((1, tn), lambda n: (0, 0))   # replicated across grid
    w2_spec = pl.BlockSpec((C, C), lambda n: (0, 0))      # replicated across grid

    # VMEM budget: fc weight blocks + ZLinear weight + biases + double-buffered
    # data/output slabs.  Clamp to the scoped range valid on all generations.
    itemsize = jnp.dtype(dt).itemsize
    vmem_bytes = itemsize * (3 * tn * tn + C * C + 4 * tn + 6 * 2 * C * tn)
    vmem_limit = int(min(max(2 * vmem_bytes, 32 << 20), 64 << 20))

    x_hat_f, p_f = pl.pallas_call(
        _imputation_kernel,
        out_shape=(jax.ShapeDtypeStruct((C, N), dt),
                   jax.ShapeDtypeStruct((C, N), dt)),
        grid_spec=pltpu.PrefetchScalarGridSpec(
            num_scalar_prefetch=0,
            grid=grid,
            in_specs=[w2_spec, blk_spec, blk_spec, blk_spec,
                      bias_spec, bias_spec, bias_spec, bias_spec,
                      data_spec, data_spec, data_spec, data_spec],
            out_specs=(data_spec, data_spec),
        ),
        compiler_params=pltpu.CompilerParams(
            dimension_semantics=("parallel",),
            vmem_limit_bytes=vmem_limit,
        ),
    )(w2z, w1_blk, w3_blk, w4_blk, b1_f, b2_f, b3_f, b4_f, x_f, c_f, m_f, d_f)

    def from_flat(a):
        return jnp.transpose(a.reshape(C, B, T), (1, 0, 2))

    return from_flat(x_hat_f), from_flat(p_f)


def imputation_block_reference(params, x, c, m, delta):
    """Pure-JAX reference matching the PyTorch module semantics."""
    w1, b1, w2, b2, w3, b3, w4, b4 = params
    hi = jax.lax.Precision.HIGHEST
    z_t = jnp.einsum("bct,ut->bcu", c, w1, precision=hi) + b1
    z_t_hat = m * c + (1.0 - m) * z_t
    w2z = w2 - jnp.diag(jnp.diagonal(w2))
    out = jnp.einsum("ij,bjt->bit", w2z, z_t_hat, precision=hi) + b2
    g3 = jnp.maximum(jnp.einsum("bct,ut->bcu", delta, w3, precision=hi) + b3, 0.0)
    g4 = jnp.maximum(jnp.einsum("bct,ut->bcu", m, w4, precision=hi) + b4, 0.0)
    namida = 1.0 / (1.0 + jnp.exp(-(g3 + g4)))
    x_hat = (1.0 - namida) * z_t + namida * out
    p = m * x + (1.0 - m) * x_hat
    return x_hat, p


if __name__ == "__main__":
    B, C, T = 2, 8, 16

    key = jax.random.PRNGKey(0)
    ks = jax.random.split(key, 12)
    # fc1 / fc3 / fc4: nn.Linear(T, T); fc2: ZLinear(C, T) (randn init).
    w1 = jax.random.normal(ks[0], (T, T), jnp.float32) / jnp.sqrt(T)
    b1 = jax.random.normal(ks[1], (T,), jnp.float32) / jnp.sqrt(T)
    w2 = jax.random.normal(ks[2], (C, C), jnp.float32)
    b2 = jax.random.normal(ks[3], (T,), jnp.float32)
    w3 = jax.random.normal(ks[4], (T, T), jnp.float32) / jnp.sqrt(T)
    b3 = jax.random.normal(ks[5], (T,), jnp.float32) / jnp.sqrt(T)
    w4 = jax.random.normal(ks[6], (T, T), jnp.float32) / jnp.sqrt(T)
    b4 = jax.random.normal(ks[7], (T,), jnp.float32) / jnp.sqrt(T)
    params = (w1, b1, w2, b2, w3, b3, w4, b4)

    x = jax.random.normal(ks[8], (B, C, T), jnp.float32)
    c = jax.random.normal(ks[9], (B, C, T), jnp.float32)
    delta = jax.random.normal(ks[10], (B, C, T), jnp.float32)
    m = (jax.random.uniform(ks[11], (B, C, T)) > 0.5).astype(jnp.float32)

    x_hat, p = imputation_block(params, x, c, m, delta)
    (x_hat, p) = jax.block_until_ready((x_hat, p))

    x_hat_ref, p_ref = imputation_block_reference(params, x, c, m, delta)

    assert x_hat.shape == (B, C, T) and p.shape == (B, C, T)
    assert jnp.allclose(x_hat, x_hat_ref, atol=1e-3, rtol=1e-3)
    assert jnp.allclose(p, p_ref, atol=1e-3, rtol=1e-3)

    print("KERNEL_OK")
</pallas_src>

<mosaic_0001>
module attributes {stable_mosaic.version = 11 : i64} {
  func.func @_imputation_kernel(%arg0: i32, %arg1: memref<8x8xf32, #tpu.memory_space<vmem>>, %arg2: memref<32x32xf32, #tpu.memory_space<vmem>>, %arg3: memref<32x32xf32, #tpu.memory_space<vmem>>, %arg4: memref<32x32xf32, #tpu.memory_space<vmem>>, %arg5: memref<1x32xf32, #tpu.memory_space<vmem>>, %arg6: memref<1x32xf32, #tpu.memory_space<vmem>>, %arg7: memref<1x32xf32, #tpu.memory_space<vmem>>, %arg8: memref<1x32xf32, #tpu.memory_space<vmem>>, %arg9: memref<8x32xf32, #tpu.memory_space<vmem>>, %arg10: memref<8x32xf32, #tpu.memory_space<vmem>>, %arg11: memref<8x32xf32, #tpu.memory_space<vmem>>, %arg12: memref<8x32xf32, #tpu.memory_space<vmem>>, %arg13: memref<8x32xf32, #tpu.memory_space<vmem>>, %arg14: memref<8x32xf32, #tpu.memory_space<vmem>>) attributes {dimension_semantics = [#tpu.dimension_semantics<parallel>], iteration_bounds = array<i64: 1>, scalar_prefetch = 0 : i64, scratch_operands = 0 : i64, tpu.core_type = #tpu.core_type<tc>, window_params = [{pipeline_mode = #tpu.pipeline_mode<synchronous>, transform_indices = @transform_0, window_bounds = array<i64: 8, 8>}, {pipeline_mode = #tpu.pipeline_mode<synchronous>, transform_indices = @transform_1, window_bounds = array<i64: 32, 32>}, {pipeline_mode = #tpu.pipeline_mode<synchronous>, transform_indices = @transform_2, window_bounds = array<i64: 32, 32>}, {pipeline_mode = #tpu.pipeline_mode<synchronous>, transform_indices = @transform_3, window_bounds = array<i64: 32, 32>}, {pipeline_mode = #tpu.pipeline_mode<synchronous>, transform_indices = @transform_4, window_bounds = array<i64: 1, 32>}, {pipeline_mode = #tpu.pipeline_mode<synchronous>, transform_indices = @transform_5, window_bounds = array<i64: 1, 32>}, {pipeline_mode = #tpu.pipeline_mode<synchronous>, transform_indices = @transform_6, window_bounds = array<i64: 1, 32>}, {pipeline_mode = #tpu.pipeline_mode<synchronous>, transform_indices = @transform_7, window_bounds = array<i64: 1, 32>}, {transform_indices = @transform_8, window_bounds = array<i64: 8, 32>}, {transform_indices = @transform_9, window_bounds = array<i64: 8, 32>}, {transform_indices = @transform_10, window_bounds = array<i64: 8, 32>}, {transform_indices = @transform_11, window_bounds = array<i64: 8, 32>}, {transform_indices = @transform_12, window_bounds = array<i64: 8, 32>}, {transform_indices = @transform_13, window_bounds = array<i64: 8, 32>}]} {
    %c0 = arith.constant 0 : index
    %c0_0 = arith.constant 0 : index
    %0 = vector.load %arg9[%c0, %c0_0] : memref<8x32xf32, #tpu.memory_space<vmem>>, vector<8x32xf32>
    %c0_1 = arith.constant 0 : index
    %c0_2 = arith.constant 0 : index
    %1 = vector.load %arg10[%c0_1, %c0_2] : memref<8x32xf32, #tpu.memory_space<vmem>>, vector<8x32xf32>
    %c0_3 = arith.constant 0 : index
    %c0_4 = arith.constant 0 : index
    %2 = vector.load %arg11[%c0_3, %c0_4] : memref<8x32xf32, #tpu.memory_space<vmem>>, vector<8x32xf32>
    %c0_5 = arith.constant 0 : index
    %c0_6 = arith.constant 0 : index
    %3 = vector.load %arg12[%c0_5, %c0_6] : memref<8x32xf32, #tpu.memory_space<vmem>>, vector<8x32xf32>
    %c0_7 = arith.constant 0 : index
    %c0_8 = arith.constant 0 : index
    %4 = vector.load %arg2[%c0_7, %c0_8] : memref<32x32xf32, #tpu.memory_space<vmem>>, vector<32x32xf32>
    %cst = arith.constant dense<0.000000e+00> : vector<8x32xf32>
    %5 = tpu.matmul %1, %4, %cst {dimension_numbers = #tpu.dot_dimension_numbers<[1], [0], [0], [1], [0, 0, 1, 1], [], []>} : vector<8x32xf32>, vector<32x32xf32>, vector<8x32xf32> -> vector<8x32xf32>
    %c0_9 = arith.constant 0 : index
    %c0_10 = arith.constant 0 : index
    %6 = vector.load %arg5[%c0_9, %c0_10] : memref<1x32xf32, #tpu.memory_space<vmem>>, vector<1x32xf32>
    %7 = vector.broadcast %6 : vector<1x32xf32> to vector<8x32xf32>
    %8 = arith.addf %5, %7 : vector<8x32xf32>
    %9 = arith.mulf %2, %1 : vector<8x32xf32>
    %cst_11 = arith.constant 1.000000e+00 : f32
    %10 = vector.broadcast %cst_11 : f32 to vector<8x32xf32>
    %11 = arith.subf %10, %2 : vector<8x32xf32>
    %12 = arith.mulf %11, %8 : vector<8x32xf32>
    %13 = arith.addf %9, %12 : vector<8x32xf32>
    %c0_12 = arith.constant 0 : index
    %c0_13 = arith.constant 0 : index
    %14 = vector.load %arg1[%c0_12, %c0_13] : memref<8x8xf32, #tpu.memory_space<vmem>>, vector<8x8xf32>
    %cst_14 = arith.constant dense<0.000000e+00> : vector<8x32xf32>
    %15 = tpu.matmul %14, %13, %cst_14 {dimension_numbers = #tpu.dot_dimension_numbers<[1], [0], [0], [1], [0, 0, 1, 1], [], []>} : vector<8x8xf32>, vector<8x32xf32>, vector<8x32xf32> -> vector<8x32xf32>
    %c0_15 = arith.constant 0 : index
    %c0_16 = arith.constant 0 : index
    %16 = vector.load %arg6[%c0_15, %c0_16] : memref<1x32xf32, #tpu.memory_space<vmem>>, vector<1x32xf32>
    %17 = vector.broadcast %16 : vector<1x32xf32> to vector<8x32xf32>
    %18 = arith.addf %15, %17 : vector<8x32xf32>
    %c0_17 = arith.constant 0 : index
    %c0_18 = arith.constant 0 : index
    %19 = vector.load %arg3[%c0_17, %c0_18] : memref<32x32xf32, #tpu.memory_space<vmem>>, vector<32x32xf32>
    %cst_19 = arith.constant dense<0.000000e+00> : vector<8x32xf32>
    %20 = tpu.matmul %3, %19, %cst_19 {dimension_numbers = #tpu.dot_dimension_numbers<[1], [0], [0], [1], [0, 0, 1, 1], [], []>} : vector<8x32xf32>, vector<32x32xf32>, vector<8x32xf32> -> vector<8x32xf32>
    %c0_20 = arith.constant 0 : index
    %c0_21 = arith.constant 0 : index
    %21 = vector.load %arg7[%c0_20, %c0_21] : memref<1x32xf32, #tpu.memory_space<vmem>>, vector<1x32xf32>
    %22 = vector.broadcast %21 : vector<1x32xf32> to vector<8x32xf32>
    %23 = arith.addf %20, %22 : vector<8x32xf32>
    %cst_22 = arith.constant 0.000000e+00 : f32
    %24 = vector.broadcast %cst_22 : f32 to vector<8x32xf32>
    %25 = arith.maximumf %23, %24 : vector<8x32xf32>
    %c0_23 = arith.constant 0 : index
    %c0_24 = arith.constant 0 : index
    %26 = vector.load %arg4[%c0_23, %c0_24] : memref<32x32xf32, #tpu.memory_space<vmem>>, vector<32x32xf32>
    %cst_25 = arith.constant dense<0.000000e+00> : vector<8x32xf32>
    %27 = tpu.matmul %2, %26, %cst_25 {dimension_numbers = #tpu.dot_dimension_numbers<[1], [0], [0], [1], [0, 0, 1, 1], [], []>} : vector<8x32xf32>, vector<32x32xf32>, vector<8x32xf32> -> vector<8x32xf32>
    %c0_26 = arith.constant 0 : index
    %c0_27 = arith.constant 0 : index
    %28 = vector.load %arg8[%c0_26, %c0_27] : memref<1x32xf32, #tpu.memory_space<vmem>>, vector<1x32xf32>
    %29 = vector.broadcast %28 : vector<1x32xf32> to vector<8x32xf32>
    %30 = arith.addf %27, %29 : vector<8x32xf32>
    %cst_28 = arith.constant 0.000000e+00 : f32
    %31 = vector.broadcast %cst_28 : f32 to vector<8x32xf32>
    %32 = arith.maximumf %30, %31 : vector<8x32xf32>
    %33 = arith.addf %25, %32 : vector<8x32xf32>
    %cst_29 = arith.constant 0.000000e+00 : f32
    %34 = vector.broadcast %cst_29 : f32 to vector<8x32xf32>
    %35 = arith.subf %34, %33 : vector<8x32xf32>
    %36 = math.exp %35 : vector<8x32xf32>
    %cst_30 = arith.constant 1.000000e+00 : f32
    %37 = vector.broadcast %cst_30 : f32 to vector<8x32xf32>
    %38 = arith.addf %37, %36 : vector<8x32xf32>
    %cst_31 = arith.constant 1.000000e+00 : f32
    %39 = vector.broadcast %cst_31 : f32 to vector<8x32xf32>
    %40 = arith.divf %39, %38 : vector<8x32xf32>
    %cst_32 = arith.constant 1.000000e+00 : f32
    %41 = vector.broadcast %cst_32 : f32 to vector<8x32xf32>
    %42 = arith.subf %41, %40 : vector<8x32xf32>
    %43 = arith.mulf %42, %8 : vector<8x32xf32>
    %44 = arith.mulf %40, %18 : vector<8x32xf32>
    %45 = arith.addf %43, %44 : vector<8x32xf32>
    %46 = arith.mulf %2, %0 : vector<8x32xf32>
    %cst_33 = arith.constant 1.000000e+00 : f32
    %47 = vector.broadcast %cst_33 : f32 to vector<8x32xf32>
    %48 = arith.subf %47, %2 : vector<8x32xf32>
    %49 = arith.mulf %48, %45 : vector<8x32xf32>
    %50 = arith.addf %46, %49 : vector<8x32xf32>
    %c0_34 = arith.constant 0 : index
    %c0_35 = arith.constant 0 : index
    %51 = vector.load %arg13[%c0_34, %c0_35] : memref<8x32xf32, #tpu.memory_space<vmem>>, vector<8x32xf32>
    tpu.vector_store %arg13[%c0_34, %c0_35], %45 {strides = array<i32>} : memref<8x32xf32, #tpu.memory_space<vmem>>, vector<8x32xf32>,
    %c0_36 = arith.constant 0 : index
    %c0_37 = arith.constant 0 : index
    %52 = vector.load %arg14[%c0_36, %c0_37] : memref<8x32xf32, #tpu.memory_space<vmem>>, vector<8x32xf32>
    tpu.vector_store %arg14[%c0_36, %c0_37], %50 {strides = array<i32>} : memref<8x32xf32, #tpu.memory_space<vmem>>, vector<8x32xf32>,
    return
  }
  func.func @transform_0(%arg0: i32) -> (i32, i32) {
    %c0_i32 = arith.constant 0 : i32
    %c0_i32_0 = arith.constant 0 : i32
    %c0_i32_1 = arith.constant 0 : i32
    return %c0_i32, %c0_i32_0 : i32, i32
  }
  func.func @transform_1(%arg0: i32) -> (i32, i32) {
    %c0_i32 = arith.constant 0 : i32
    %c0_i32_0 = arith.constant 0 : i32
    %c0_i32_1 = arith.constant 0 : i32
    return %c0_i32, %c0_i32_0 : i32, i32
  }
  func.func @transform_2(%arg0: i32) -> (i32, i32) {
    %c0_i32 = arith.constant 0 : i32
    %c0_i32_0 = arith.constant 0 : i32
    %c0_i32_1 = arith.constant 0 : i32
    return %c0_i32, %c0_i32_0 : i32, i32
  }
  func.func @transform_3(%arg0: i32) -> (i32, i32) {
    %c0_i32 = arith.constant 0 : i32
    %c0_i32_0 = arith.constant 0 : i32
    %c0_i32_1 = arith.constant 0 : i32
    return %c0_i32, %c0_i32_0 : i32, i32
  }
  func.func @transform_4(%arg0: i32) -> (i32, i32) {
    %c0_i32 = arith.constant 0 : i32
    %c0_i32_0 = arith.constant 0 : i32
    %c0_i32_1 = arith.constant 0 : i32
    return %c0_i32, %c0_i32_0 : i32, i32
  }
  func.func @transform_5(%arg0: i32) -> (i32, i32) {
    %c0_i32 = arith.constant 0 : i32
    %c0_i32_0 = arith.constant 0 : i32
    %c0_i32_1 = arith.constant 0 : i32
    return %c0_i32, %c0_i32_0 : i32, i32
  }
  func.func @transform_6(%arg0: i32) -> (i32, i32) {
    %c0_i32 = arith.constant 0 : i32
    %c0_i32_0 = arith.constant 0 : i32
    %c0_i32_1 = arith.constant 0 : i32
    return %c0_i32, %c0_i32_0 : i32, i32
  }
  func.func @transform_7(%arg0: i32) -> (i32, i32) {
    %c0_i32 = arith.constant 0 : i32
    %c0_i32_0 = arith.constant 0 : i32
    %c0_i32_1 = arith.constant 0 : i32
    return %c0_i32, %c0_i32_0 : i32, i32
  }
  func.func @transform_8(%arg0: i32) -> (i32, i32) {
    %c0_i32 = arith.constant 0 : i32
    %c0_i32_0 = arith.constant 0 : i32
    return %c0_i32, %arg0 : i32, i32
  }
  func.func @transform_9(%arg0: i32) -> (i32, i32) {
    %c0_i32 = arith.constant 0 : i32
    %c0_i32_0 = arith.constant 0 : i32
    return %c0_i32, %arg0 : i32, i32
  }
  func.func @transform_10(%arg0: i32) -> (i32, i32) {
    %c0_i32 = arith.constant 0 : i32
    %c0_i32_0 = arith.constant 0 : i32
    return %c0_i32, %arg0 : i32, i32
  }
  func.func @transform_11(%arg0: i32) -> (i32, i32) {
    %c0_i32 = arith.constant 0 : i32
    %c0_i32_0 = arith.constant 0 : i32
    return %c0_i32, %arg0 : i32, i32
  }
  func.func @transform_12(%arg0: i32) -> (i32, i32) {
    %c0_i32 = arith.constant 0 : i32
    %c0_i32_0 = arith.constant 0 : i32
    return %c0_i32, %arg0 : i32, i32
  }
  func.func @transform_13(%arg0: i32) -> (i32, i32) {
    %c0_i32 = arith.constant 0 : i32
    %c0_i32_0 = arith.constant 0 : i32
    return %c0_i32, %arg0 : i32, i32
  }
}

</mosaic_0001>

<llo_original>
// kernel: tpu_custom_call.1
$region0: #{tpu_custom_call.1}
  #allocation0 [shape = 'u32[]', space=smem, size = 0x4, offset = 0x4, fixed_abs, tag = 'smem constant byte address 0x4 - core index']
  #allocation1 [shape = 'u32[72,128]{1,0:T(1,128)}', space=vmem, size = 0x9000, scoped, tag = 'internal scratch']
  %s0 = inlined_call_operand.hbm [shape: f32[8,8], index: 0, kind: input, shape index: {}]
  %s1 = inlined_call_operand.hbm [shape: f32[32,32], index: 1, kind: input, shape index: {}]
  %s2 = inlined_call_operand.hbm [shape: f32[32,32], index: 2, kind: input, shape index: {}]
  %s3 = inlined_call_operand.hbm [shape: f32[32,32], index: 3, kind: input, shape index: {}]
  %s4 = inlined_call_operand.hbm [shape: f32[1,32], index: 4, kind: input, shape index: {}]
  %s5 = inlined_call_operand.hbm [shape: f32[1,32], index: 5, kind: input, shape index: {}]
  %s6 = inlined_call_operand.hbm [shape: f32[1,32], index: 6, kind: input, shape index: {}]
  %s7 = inlined_call_operand.hbm [shape: f32[1,32], index: 7, kind: input, shape index: {}]
  %s8 = inlined_call_operand.hbm [shape: f32[8,32], index: 8, kind: input, shape index: {}]
  %s9 = inlined_call_operand.vmem [shape: f32[8,32], index: 9, kind: input, shape index: {}]
  %s10 = inlined_call_operand.hbm [shape: f32[8,32], index: 10, kind: input, shape index: {}]
  %s11 = inlined_call_operand.hbm [shape: f32[8,32], index: 11, kind: input, shape index: {}]
  %s12 = inlined_call_operand.hbm [shape: f32[8,32], index: 12, kind: output, shape index: {0}]
  %s13 = inlined_call_operand.hbm [shape: f32[8,32], index: 13, kind: output, shape index: {1}]
  %14 = xla_tuple %s12, %s13
  %s15 = sld [smem:[#allocation0]]
  $region110: #{tpu_custom_call.1} parent=0
    _
  %s17 = ssub.s32 1, %s15
  %s18 = scalar_select 0, %s17, %s15
  $region1: #{tpu_custom_call.1} parent=0
    #allocation2 [shape = 'u8[4096]{0}', space=vmem, size = 0x1000, scoped, tag = 'input window, operand 0, single buffered']
    #allocation3 [shape = 's32[1]{0}', space=sflag, size = 0x4, scoped, tag = 'scoped memory for tpu_custom_call.1']
    #allocation4 [shape = 's32[1]{0}', space=sflag, size = 0x4, scoped, tag = 'scoped memory for tpu_custom_call.1']
    #allocation5 [shape = 'u8[16384]{0}', space=vmem, size = 0x4000, scoped, tag = 'input window, operand 1, single buffered']
    #allocation6 [shape = 's32[1]{0}', space=sflag, size = 0x4, scoped, tag = 'scoped memory for tpu_custom_call.1']
    #allocation7 [shape = 'u8[16384]{0}', space=vmem, size = 0x4000, scoped, tag = 'input window, operand 2, single buffered']
    #allocation8 [shape = 'u8[16384]{0}', space=vmem, size = 0x4000, scoped, tag = 'input window, operand 3, single buffered']
    #allocation9 [shape = 's32[1]{0}', space=sflag, size = 0x4, scoped, tag = 'scoped memory for tpu_custom_call.1']
    #allocation10 [shape = 'u8[512]{0}', space=vmem, size = 0x400, scoped, tag = 'input window, operand 4, single buffered']
    #allocation11 [shape = 'u8[512]{0}', space=vmem, size = 0x400, scoped, tag = 'input window, operand 5, single buffered']
    #allocation12 [shape = 's32[1]{0}', space=sflag, size = 0x4, scoped, tag = 'scoped memory for tpu_custom_call.1']
    #allocation13 [shape = 'u8[512]{0}', space=vmem, size = 0x400, scoped, tag = 'input window, operand 6, single buffered']
    #allocation14 [shape = 'u8[512]{0}', space=vmem, size = 0x400, scoped, tag = 'input window, operand 7, single buffered']
    #allocation15 [shape = 's32[1]{0}', space=sflag, size = 0x4, scoped, tag = 'scoped memory for tpu_custom_call.1']
    #allocation16 [shape = 'u8[4096]{0}', space=vmem, size = 0x1000, scoped, tag = 'input window, operand 8, single buffered']
    #allocation17 [shape = 'u8[4096]{0}', space=vmem, size = 0x1000, scoped, tag = 'input window, operand 10, single buffered']
    #allocation18 [shape = 's32[1]{0}', space=sflag, size = 0x4, scoped, tag = 'scoped memory for tpu_custom_call.1']
    #allocation19 [shape = 'u8[4096]{0}', space=vmem, size = 0x1000, scoped, tag = 'input window, operand 11, single buffered']
    #allocation20 [shape = 'u8[4096]{0}', space=vmem, size = 0x1000, scoped, tag = 'output window, operand 0, single buffered']
    #allocation21 [shape = 'u8[4096]{0}', space=vmem, size = 0x1000, scoped, tag = 'output window, operand 1, single buffered']
    #allocation22 [shape = 's32[1]{0}', space=sflag, size = 0x4, scoped, tag = 'scoped memory for tpu_custom_call.1']
    %19 = vsyncpa [#allocation3], 0
    %20 = vsyncpa [#allocation6], 0
    %21 = vsyncpa [#allocation9], 0
    %22 = vsyncpa [#allocation12], 0
    %23 = vsyncpa [#allocation15], 0
    %24 = vsyncpa [#allocation18], 0
    %25 = vsyncpa [#allocation4], 0
    %26 = vsyncpa [#allocation22], 0
    // Predicated region
    $region2: #{tpu_custom_call.1} parent=1 // pred_check
      _
    $region3: #{tpu_custom_call.1} parent=1 // pred_check_branch
      %28 = sbr.rel (0) target = $region5
    $region4: #{tpu_custom_call.1} parent=1 // pred_region
      %30 = vsyncadd [#allocation3], 0
      %s32 = sshll.u32 %s0, 4
      %s33 = int_to_ptr.hbm [resolvable:$true] %s32
      %s34 = sshll.u32 [#allocation2], 4
      %s35 = int_to_ptr.vmem [resolvable:$true] %s34
      %37 = dma.hbm_to_vmem [thread:$0]  %s33, 128, %s35, [#allocation3]
    $region5: #{tpu_custom_call.1} parent=1 // pred_fallthru
      _
    // Predicated region
    $region6: #{tpu_custom_call.1} parent=1 // pred_check
      _
    $region7: #{tpu_custom_call.1} parent=1 // pred_check_branch
      %39 = sbr.rel (0) target = $region9
    $region8: #{tpu_custom_call.1} parent=1 // pred_region
      %41 = vsyncadd [#allocation6], 0
      %s42 = sshll.u32 %s1, 4
      %s43 = int_to_ptr.hbm [resolvable:$true] %s42
      %s44 = sshll.u32 [#allocation5], 4
      %s45 = int_to_ptr.vmem [resolvable:$true] %s44
      %50 = dma.hbm_to_vmem [thread:$0]  %s43, 512, %s45, [#allocation6], 128, 128, 8
    $region9: #{tpu_custom_call.1} parent=1 // pred_fallthru
      _
    // Predicated region
    $region10: #{tpu_custom_call.1} parent=1 // pred_check
      _
    $region11: #{tpu_custom_call.1} parent=1 // pred_check_branch
      %52 = sbr.rel (0) target = $region13
    $region12: #{tpu_custom_call.1} parent=1 // pred_region
      %54 = vsyncadd [#allocation6], 0
      %s55 = sshll.u32 %s2, 4
      %s56 = int_to_ptr.hbm [resolvable:$true] %s55
      %s57 = sshll.u32 [#allocation7], 4
      %s58 = int_to_ptr.vmem [resolvable:$true] %s57
      %63 = dma.hbm_to_vmem [thread:$0]  %s56, 512, %s58, [#allocation6], 128, 128, 8
    $region13: #{tpu_custom_call.1} parent=1 // pred_fallthru
      _
    // Predicated region
    $region14: #{tpu_custom_call.1} parent=1 // pred_check
      _
    $region15: #{tpu_custom_call.1} parent=1 // pred_check_branch
      %65 = sbr.rel (0) target = $region17
    $region16: #{tpu_custom_call.1} parent=1 // pred_region
      %67 = vsyncadd [#allocation9], 0
      %s68 = sshll.u32 %s3, 4
      %s69 = int_to_ptr.hbm [resolvable:$true] %s68
      %s70 = sshll.u32 [#allocation8], 4
      %s71 = int_to_ptr.vmem [resolvable:$true] %s70
      %76 = dma.hbm_to_vmem [thread:$0]  %s69, 512, %s71, [#allocation9], 128, 128, 8
    $region17: #{tpu_custom_call.1} parent=1 // pred_fallthru
      _
    // Predicated region
    $region18: #{tpu_custom_call.1} parent=1 // pred_check
      _
    $region19: #{tpu_custom_call.1} parent=1 // pred_check_branch
      %78 = sbr.rel (0) target = $region21
    $region20: #{tpu_custom_call.1} parent=1 // pred_region
      %80 = vsyncadd [#allocation9], 0
      %s82 = sshll.u32 %s4, 4
      %s83 = int_to_ptr.hbm [resolvable:$true] %s82
      %s84 = sshll.u32 [#allocation10], 4
      %s85 = int_to_ptr.vmem [resolvable:$true] %s84
      %87 = dma.hbm_to_vmem [thread:$0]  %s83, 16, %s85, [#allocation9]
    $region21: #{tpu_custom_call.1} parent=1 // pred_fallthru
      _
    // Predicated region
    $region22: #{tpu_custom_call.1} parent=1 // pred_check
      _
    $region23: #{tpu_custom_call.1} parent=1 // pred_check_branch
      %89 = sbr.rel (0) target = $region25
    $region24: #{tpu_custom_call.1} parent=1 // pred_region
      %91 = vsyncadd [#allocation12], 0
      %s93 = sshll.u32 %s5, 4
      %s94 = int_to_ptr.hbm [resolvable:$true] %s93
      %s95 = sshll.u32 [#allocation11], 4
      %s96 = int_to_ptr.vmem [resolvable:$true] %s95
      %98 = dma.hbm_to_vmem [thread:$0]  %s94, 16, %s96, [#allocation12]
    $region25: #{tpu_custom_call.1} parent=1 // pred_fallthru
      _
    // Predicated region
    $region26: #{tpu_custom_call.1} parent=1 // pred_check
      _
    $region27: #{tpu_custom_call.1} parent=1 // pred_check_branch
      %100 = sbr.rel (0) target = $region29
    $region28: #{tpu_custom_call.1} parent=1 // pred_region
      %102 = vsyncadd [#allocation12], 0
      %s104 = sshll.u32 %s6, 4
      %s105 = int_to_ptr.hbm [resolvable:$true] %s104
      %s106 = sshll.u32 [#allocation13], 4
      %s107 = int_to_ptr.vmem [resolvable:$true] %s106
      %109 = dma.hbm_to_vmem [thread:$0]  %s105, 16, %s107, [#allocation12]
    $region29: #{tpu_custom_call.1} parent=1 // pred_fallthru
      _
    // Predicated region
    $region30: #{tpu_custom_call.1} parent=1 // pred_check
      _
    $region31: #{tpu_custom_call.1} parent=1 // pred_check_branch
      %111 = sbr.rel (0) target = $region33
    $region32: #{tpu_custom_call.1} parent=1 // pred_region
      %113 = vsyncadd [#allocation15], 0
      %s115 = sshll.u32 %s7, 4
      %s116 = int_to_ptr.hbm [resolvable:$true] %s115
      %s117 = sshll.u32 [#allocation14], 4
      %s118 = int_to_ptr.vmem [resolvable:$true] %s117
      %120 = dma.hbm_to_vmem [thread:$0]  %s116, 16, %s118, [#allocation15]
    $region33: #{tpu_custom_call.1} parent=1 // pred_fallthru
      _
    // Predicated region
    $region34: #{tpu_custom_call.1} parent=1 // pred_check
      _
    $region35: #{tpu_custom_call.1} parent=1 // pred_check_branch
      %122 = sbr.rel (0) target = $region37
    $region36: #{tpu_custom_call.1} parent=1 // pred_region
      %124 = vsyncadd [#allocation15], 0
      %s126 = sshll.u32 %s8, 4
      %s127 = int_to_ptr.hbm [resolvable:$true] %s126
      %s128 = sshll.u32 [#allocation16], 4
      %s129 = int_to_ptr.vmem [resolvable:$true] %s128
      %131 = dma.hbm_to_vmem [thread:$0]  %s127, 128, %s129, [#allocation15]
    $region37: #{tpu_custom_call.1} parent=1 // pred_fallthru
      _
    // Predicated region
    $region38: #{tpu_custom_call.1} parent=1 // pred_check
      _
    $region39: #{tpu_custom_call.1} parent=1 // pred_check_branch
      %133 = sbr.rel (0) target = $region41
    $region40: #{tpu_custom_call.1} parent=1 // pred_region
      _
    $region41: #{tpu_custom_call.1} parent=1 // pred_fallthru
      _
    // Predicated region
    $region42: #{tpu_custom_call.1} parent=1 // pred_check
      _
    $region43: #{tpu_custom_call.1} parent=1 // pred_check_branch
      %135 = sbr.rel (0) target = $region45
    $region44: #{tpu_custom_call.1} parent=1 // pred_region
      %137 = vsyncadd [#allocation18], 0
      %s139 = sshll.u32 %s10, 4
      %s140 = int_to_ptr.hbm [resolvable:$true] %s139
      %s141 = sshll.u32 [#allocation17], 4
      %s142 = int_to_ptr.vmem [resolvable:$true] %s141
      %144 = dma.hbm_to_vmem [thread:$0]  %s140, 128, %s142, [#allocation18]
    $region45: #{tpu_custom_call.1} parent=1 // pred_fallthru
      _
    // Predicated region
    $region46: #{tpu_custom_call.1} parent=1 // pred_check
      _
    $region47: #{tpu_custom_call.1} parent=1 // pred_check_branch
      %146 = sbr.rel (0) target = $region49
    $region48: #{tpu_custom_call.1} parent=1 // pred_region
      %148 = vsyncadd [#allocation18], 0
      %s150 = sshll.u32 %s11, 4
      %s151 = int_to_ptr.hbm [resolvable:$true] %s150
      %s152 = sshll.u32 [#allocation19], 4
      %s153 = int_to_ptr.vmem [resolvable:$true] %s152
      %155 = dma.hbm_to_vmem [thread:$0]  %s151, 128, %s153, [#allocation18]
    $region49: #{tpu_custom_call.1} parent=1 // pred_fallthru
      _
    // Predicated region
    $region50: #{tpu_custom_call.1} parent=1 // pred_check
      _
    $region51: #{tpu_custom_call.1} parent=1 // pred_check_branch
      %157 = sbr.rel (0) target = $region53
    $region52: #{tpu_custom_call.1} parent=1 // pred_region
      %159 = dma.done [#allocation3], 128
    $region53: #{tpu_custom_call.1} parent=1 // pred_fallthru
      _
    // Predicated region
    $region54: #{tpu_custom_call.1} parent=1 // pred_check
      _
    $region55: #{tpu_custom_call.1} parent=1 // pred_check_branch
      %161 = sbr.rel (0) target = $region57
    $region56: #{tpu_custom_call.1} parent=1 // pred_region
      %163 = dma.done [#allocation6], 512
    $region57: #{tpu_custom_call.1} parent=1 // pred_fallthru
      _
    // Predicated region
    $region58: #{tpu_custom_call.1} parent=1 // pred_check
      _
    $region59: #{tpu_custom_call.1} parent=1 // pred_check_branch
      %165 = sbr.rel (0) target = $region61
    $region60: #{tpu_custom_call.1} parent=1 // pred_region
      %167 = dma.done [#allocation6], 512
    $region61: #{tpu_custom_call.1} parent=1 // pred_fallthru
      _
    // Predicated region
    $region62: #{tpu_custom_call.1} parent=1 // pred_check
      _
    $region63: #{tpu_custom_call.1} parent=1 // pred_check_branch
      %169 = sbr.rel (0) target = $region65
    $region64: #{tpu_custom_call.1} parent=1 // pred_region
      %171 = dma.done [#allocation9], 512
    $region65: #{tpu_custom_call.1} parent=1 // pred_fallthru
      _
    // Predicated region
    $region66: #{tpu_custom_call.1} parent=1 // pred_check
      _
    $region67: #{tpu_custom_call.1} parent=1 // pred_check_branch
      %173 = sbr.rel (0) target = $region69
    $region68: #{tpu_custom_call.1} parent=1 // pred_region
      %175 = dma.done [#allocation9], 16
    $region69: #{tpu_custom_call.1} parent=1 // pred_fallthru
      _
    // Predicated region
    $region70: #{tpu_custom_call.1} parent=1 // pred_check
      _
    $region71: #{tpu_custom_call.1} parent=1 // pred_check_branch
      %177 = sbr.rel (0) target = $region73
    $region72: #{tpu_custom_call.1} parent=1 // pred_region
      %179 = dma.done [#allocation12], 16
    $region73: #{tpu_custom_call.1} parent=1 // pred_fallthru
      _
    // Predicated region
    $region74: #{tpu_custom_call.1} parent=1 // pred_check
      _
    $region75: #{tpu_custom_call.1} parent=1 // pred_check_branch
      %181 = sbr.rel (0) target = $region77
    $region76: #{tpu_custom_call.1} parent=1 // pred_region
      %183 = dma.done [#allocation12], 16
    $region77: #{tpu_custom_call.1} parent=1 // pred_fallthru
      _
    // Predicated region
    $region78: #{tpu_custom_call.1} parent=1 // pred_check
      _
    $region79: #{tpu_custom_call.1} parent=1 // pred_check_branch
      %185 = sbr.rel (0) target = $region81
    $region80: #{tpu_custom_call.1} parent=1 // pred_region
      %187 = dma.done [#allocation15], 16
    $region81: #{tpu_custom_call.1} parent=1 // pred_fallthru
      _
    // Predicated region
    $region82: #{tpu_custom_call.1} parent=1 // pred_check
      _
    $region83: #{tpu_custom_call.1} parent=1 // pred_check_branch
      %189 = sbr.rel (0) target = $region85
    $region84: #{tpu_custom_call.1} parent=1 // pred_region
      %191 = dma.done [#allocation15], 128
    $region85: #{tpu_custom_call.1} parent=1 // pred_fallthru
      _
    // Predicated region
    $region86: #{tpu_custom_call.1} parent=1 // pred_check
      _
    $region87: #{tpu_custom_call.1} parent=1 // pred_check_branch
      %193 = sbr.rel (0) target = $region89
    $region88: #{tpu_custom_call.1} parent=1 // pred_region
      %195 = dma.done [#allocation18], 128
    $region89: #{tpu_custom_call.1} parent=1 // pred_fallthru
      _
    // Predicated region
    $region90: #{tpu_custom_call.1} parent=1 // pred_check
      _
    $region91: #{tpu_custom_call.1} parent=1 // pred_check_branch
      %197 = sbr.rel (0) target = $region93
    $region92: #{tpu_custom_call.1} parent=1 // pred_region
      %199 = dma.done [#allocation18], 128
    $region93: #{tpu_custom_call.1} parent=1 // pred_fallthru
      _
    %v200 = vld [vmem:[#allocation16] sm:$0xff]
    %v201 = vld [vmem:[%s9] sm:$0xff]
    %v202 = vld [vmem:[#allocation17] sm:$0xff]
    %v203 = vld [vmem:[#allocation19] sm:$0xff]
    %v204 = vld [vmem:[#allocation5] sm:$0xff]
    %v205 = vld [vmem:[#allocation5 + $0x8] sm:$0xff]
    %v206 = vld [vmem:[#allocation5 + $0x10] sm:$0xff]
    %v207 = vld [vmem:[#allocation5 + $0x18] sm:$0xff]
    %v208 = vld [vmem:[#allocation10] sm:$0x1]
    %v210 = vperm.slane %v208, 0
    %vm212 = vcmask 261120
    %v214 = vsel %vm212, %v201, 0
    %216 = vmatpush.msra.mxu0 0.0
    %217 = vmatpush.msra.mxu0 0.0
    %218 = vmatpush.msra.mxu0 0.0
    %219 = vmatpush.msra.mxu0 0.0
    %220 = vmatpush.msra.mxu0 0.0
    %221 = vmatpush.msra.mxu0 0.0
    %222 = vmatpush.msra.mxu0 0.0
    %223 = vmatpush.msra.mxu0 0.0
    %224 = vmatpush.msra.mxu0 0.0
    %225 = vmatpush.msra.mxu0 0.0
    %226 = vmatpush.msra.mxu0 0.0
    %227 = vmatpush.msra.mxu0 0.0
    %228 = vmatpush.msra.mxu0 %v207
    %229 = vmatpush.msra.mxu0 %v206
    %230 = vmatpush.msra.mxu0 %v205
    %231 = vmatpush.msra.mxu0 %v204
    %232 = vmatmul.f32.gmra.mxu0 %v214
    %v233 = vpop.f32.mrf.mxu0
    %v234 = vadd.f32 %v210, %v233
    %235 = vdwg.mxu0
    %v236 = vmul.f32 %v202, %v201
    %v237 = vsub.f32 1.0, %v202
    %v238 = vmul.f32 %v237, %v234
    %v239 = vadd.f32 %v236, %v238
    %v240 = vld [vmem:[#allocation2] sm:$0xff]
    %v241 = vld [vmem:[#allocation11] sm:$0x1]
    %v243 = vperm.slane %v241, 0
    %vm245 = vcmask 64512
    %v247 = vsel %vm245, %v240, 0
    %249 = vmatpush.msra.mxu0 0.0
    %250 = vmatpush.msra.mxu0 0.0
    %251 = vmatpush.msra.mxu0 0.0
    %252 = vmatpush.msra.mxu0 0.0
    %253 = vmatpush.msra.mxu0 0.0
    %254 = vmatpush.msra.mxu0 0.0
    %255 = vmatpush.msra.mxu0 0.0
    %256 = vmatpush.msra.mxu0 0.0
    %257 = vmatpush.msra.mxu0 0.0
    %258 = vmatpush.msra.mxu0 0.0
    %259 = vmatpush.msra.mxu0 0.0
    %260 = vmatpush.msra.mxu0 0.0
    %261 = vmatpush.msra.mxu0 0.0
    %262 = vmatpush.msra.mxu0 0.0
    %263 = vmatpush.msra.mxu0 0.0
    %264 = vmatpush.msra.mxu0 %v239
    %265 = vmatmul.f32.gmra.mxu0 %v247
    %v266 = vpop.f32.mrf.mxu0
    %v267 = vadd.f32 %v243, %v266
    %268 = vdwg.mxu0
    %v269 = vld [vmem:[#allocation7] sm:$0xff]
    %v270 = vld [vmem:[#allocation7 + $0x8] sm:$0xff]
    %v271 = vld [vmem:[#allocation7 + $0x10] sm:$0xff]
    %v272 = vld [vmem:[#allocation7 + $0x18] sm:$0xff]
    %v273 = vld [vmem:[#allocation13] sm:$0x1]
    %v275 = vperm.slane %v273, 0
    %v278 = vsel %vm212, %v203, 0
    %280 = vmatpush.msra.mxu0 0.0
    %281 = vmatpush.msra.mxu0 0.0
    %282 = vmatpush.msra.mxu0 0.0
    %283 = vmatpush.msra.mxu0 0.0
    %284 = vmatpush.msra.mxu0 0.0
    %285 = vmatpush.msra.mxu0 0.0
    %286 = vmatpush.msra.mxu0 0.0
    %287 = vmatpush.msra.mxu0 0.0
    %288 = vmatpush.msra.mxu0 0.0
    %289 = vmatpush.msra.mxu0 0.0
    %290 = vmatpush.msra.mxu0 0.0
    %291 = vmatpush.msra.mxu0 0.0
    %292 = vmatpush.msra.mxu0 %v272
    %293 = vmatpush.msra.mxu0 %v271
    %294 = vmatpush.msra.mxu0 %v270
    %295 = vmatpush.msra.mxu0 %v269
    %296 = vmatmul.f32.gmra.mxu0 %v278
    %v297 = vpop.f32.mrf.mxu0
    %v298 = vadd.f32 %v275, %v297
    %299 = vdwg.mxu0
    %v300 = vmax.f32 %v298, 0.0
    %v301 = vld [vmem:[#allocation8] sm:$0xff]
    %v302 = vld [vmem:[#allocation8 + $0x8] sm:$0xff]
    %v303 = vld [vmem:[#allocation8 + $0x10] sm:$0xff]
    %v304 = vld [vmem:[#allocation8 + $0x18] sm:$0xff]
    %v305 = vld [vmem:[#allocation14] sm:$0x1]
    %v307 = vperm.slane %v305, 0
    %v310 = vsel %vm212, %v202, 0
    %312 = vmatpush.msra.mxu0 0.0
    %313 = vmatpush.msra.mxu0 0.0
    %314 = vmatpush.msra.mxu0 0.0
    %315 = vmatpush.msra.mxu0 0.0
    %316 = vmatpush.msra.mxu0 0.0
    %317 = vmatpush.msra.mxu0 0.0
    %318 = vmatpush.msra.mxu0 0.0
    %319 = vmatpush.msra.mxu0 0.0
    %320 = vmatpush.msra.mxu0 0.0
    %321 = vmatpush.msra.mxu0 0.0
    %322 = vmatpush.msra.mxu0 0.0
    %323 = vmatpush.msra.mxu0 0.0
    %324 = vmatpush.msra.mxu0 %v304
    %325 = vmatpush.msra.mxu0 %v303
    %326 = vmatpush.msra.mxu0 %v302
    %327 = vmatpush.msra.mxu0 %v301
    %328 = vmatmul.f32.gmra.mxu0 %v310
    %v329 = vpop.f32.mrf.mxu0
    %v330 = vadd.f32 %v307, %v329
    %331 = vdwg.mxu0
    %v332 = vmax.f32 %v330, 0.0
    %v333 = vadd.f32 %v300, %v332
    %v334 = vsub.f32 0.0, %v333
    %v335 = vmul.f32 %v334, 1.442695
    %v336 = vpow.pop %v335
    %v337 = vadd.f32 %v336, 1.0
    %v338 = vrcp.pop %v337
    %v339 = vmul.f32 %v337, %v338
    %v340 = vsub.f32 1.0, %v339
    %v341 = vmul.f32 %v338, %v340
    %v342 = vadd.f32 %v338, %v341
    %vm343 = vweird.f32 %v337
    %vm344 = vweird.f32 %v338
    %vm345 = vmor %vm343, %vm344
    %v346 = vsel %vm345, %v338, %v342
    %v347 = vand.u32 2147483647, %v337
    %vm348 = vcmp.eq.f32.partialorder %v347, 8.507059e+37
    %v349 = vand.u32 %v337, 2147483648
    %v350 = vor.u32 1.1754944e-38, %v349
    %v351 = vsel %vm348, %v350, %v346
    %v352 = vmul.f32 1.0, %v351
    %v353 = vsub.f32 1.0, %v352
    %v354 = vmul.f32 %v353, %v234
    %v355 = vmul.f32 %v352, %v267
    %v356 = vadd.f32 %v354, %v355
    %v357 = vmul.f32 %v202, %v200
    %v358 = vmul.f32 %v237, %v356
    %v359 = vadd.f32 %v357, %v358
    %360 = vst.msk [vmem:[#allocation20] sm:$0xff] %vm212, %v356
    %361 = vst.msk [vmem:[#allocation21] sm:$0xff] %vm212, %v359
    // Predicated region
    $region94: #{tpu_custom_call.1} parent=1 // pred_check
      _
    $region95: #{tpu_custom_call.1} parent=1 // pred_check_branch
      %363 = sbr.rel (0) target = $region97
    $region96: #{tpu_custom_call.1} parent=1 // pred_region
      %365 = vsyncadd [#allocation4], 0
      %s367 = sshll.u32 [#allocation20], 4
      %s368 = int_to_ptr.vmem [resolvable:$true] %s367
      %s369 = sshll.u32 %s12, 4
      %s370 = int_to_ptr.hbm [resolvable:$true] %s369
      %372 = dma.vmem_to_hbm [thread:$0]  %s368, 128, %s370, [#allocation4]
    $region97: #{tpu_custom_call.1} parent=1 // pred_fallthru
      _
    // Predicated region
    $region98: #{tpu_custom_call.1} parent=1 // pred_check
      _
    $region99: #{tpu_custom_call.1} parent=1 // pred_check_branch
      %374 = sbr.rel (0) target = $region101
    $region100: #{tpu_custom_call.1} parent=1 // pred_region
      %376 = vsyncadd [#allocation22], 0
      %s378 = sshll.u32 [#allocation21], 4
      %s379 = int_to_ptr.vmem [resolvable:$true] %s378
      %s380 = sshll.u32 %s13, 4
      %s381 = int_to_ptr.hbm [resolvable:$true] %s380
      %383 = dma.vmem_to_hbm [thread:$0]  %s379, 128, %s381, [#allocation22]
    $region101: #{tpu_custom_call.1} parent=1 // pred_fallthru
      _
    // Predicated region
    $region102: #{tpu_custom_call.1} parent=1 // pred_check
      _
    $region103: #{tpu_custom_call.1} parent=1 // pred_check_branch
      %385 = sbr.rel (0) target = $region105
    $region104: #{tpu_custom_call.1} parent=1 // pred_region
      %387 = dma.done [#allocation4], 128
    $region105: #{tpu_custom_call.1} parent=1 // pred_fallthru
      _
    // Predicated region
    $region106: #{tpu_custom_call.1} parent=1 // pred_check
      _
    $region107: #{tpu_custom_call.1} parent=1 // pred_check_branch
      %389 = sbr.rel (0) target = $region109
    $region108: #{tpu_custom_call.1} parent=1 // pred_region
      %391 = dma.done [#allocation22], 128
    $region109: #{tpu_custom_call.1} parent=1 // pred_fallthru
      _
    %392 = vsyncpa [#allocation3], 1
    %393 = vsyncpa [#allocation6], 1
    %394 = vsyncpa [#allocation9], 1
    %395 = vsyncpa [#allocation12], 1
    %396 = vsyncpa [#allocation15], 1
    %397 = vsyncpa [#allocation18], 1
    %398 = vsyncpa [#allocation4], 1
    %399 = vsyncpa [#allocation22], 1

</llo_original>
